<compile_context>
chip_gen: v7x
topology: tpu7x:2x2x1
jax: 0.10.0
libtpu: 0.0.40
codegen_flags: <defaults>
</compile_context>

<pallas_src>
import functools

import jax
import jax.numpy as jnp
import numpy as np
from jax.experimental import pallas as pl
from jax.experimental.pallas import tpu as pltpu

REDUCTION = 4
BN_EPS = 1e-5


def _device_budgets():
    """(block_bytes, vmem_limit_bytes) picked from the TPU generation.

    Apply-kernel working set ~ 4 x block (double-buffered x in + out; the gate
    is tiny), pool ~ 2 x block, so these leave comfortable headroom.
    """
    vmem_cap = 64 * 1024 * 1024                      # conservative default (v7x per-TC)
    try:
        info = pltpu.get_tpu_info()
        vmem_cap = int(getattr(info, "vmem_capacity_bytes", vmem_cap))
    except Exception:                                # no TPU visible / older API
        pass
    if vmem_cap >= 96 * 1024 * 1024:                 # v5e / v6e: 128 MiB physical VMEM
        return 12 * 1024 * 1024, 96 * 1024 * 1024
    return 6 * 1024 * 1024, 44 * 1024 * 1024         # v7x: 64 MiB per TensorCore


def _choose_tiles(T, C, HW, itemsize, block_bytes):
    """Pick (tile_T, tile_HW, padded_HW) for the streaming kernels.

    Preference order (per perf review):
      1. Keep tile_HW == HW (one contiguous DMA per (t, c) row group) and grow
         tile_T; T is not one of the last two dims of the x blocks, so any
         divisor of T is legal there.  For the tiny (1, tile_T, C) pooled /
         scale blocks we prefer sublane-friendly sizes (multiple of 8 or == T)
         when one fits.
      2. Only if a single time step exceeds the budget, split HW on 128-lane
         boundaries, zero-padding HW so every tile is lane-aligned even for
         spatial sizes like 56x56 (prevents the v2 VMEM-OOM fallback).
    """
    bytes_per_t = C * HW * itemsize
    if bytes_per_t <= block_bytes:
        divs = [d for d in range(1, T + 1) if T % d == 0]
        fitting = [d for d in divs if d * bytes_per_t <= block_bytes]
        nice = [d for d in fitting if d % 8 == 0 or d == T]
        tile_T = max(nice) if nice else max(fitting)
        return tile_T, HW, HW
    tile_hw = max(128, (block_bytes // (C * itemsize)) // 128 * 128)
    padded_hw = ((HW + tile_hw - 1) // tile_hw) * tile_hw
    return 1, tile_hw, padded_hw


# ------------------------------------------------------------------
# Kernel 1: global average pool over HW (f32 accumulator) -> (B, T, C) f32
# ------------------------------------------------------------------
def _pool_kernel(x_ref, pooled_ref, acc_ref, *, inv_hw):
    # x_ref: (1, tT, C, tHW)   pooled_ref / acc_ref: (1, tT, C) f32
    k = pl.program_id(2)

    @pl.when(k == 0)
    def _():
        acc_ref[...] = jnp.zeros_like(acc_ref)

    # dtype=f32 fuses the upcast into the lane reduction (no f32 block copy).
    acc_ref[...] += jnp.sum(x_ref[...], axis=-1, dtype=jnp.float32)

    @pl.when(k == pl.num_programs(2) - 1)
    def _():
        # inv_hw uses the *true* HW, so any zero-padded lanes are exact no-ops.
        pooled_ref[...] = acc_ref[...] * inv_hw


# ------------------------------------------------------------------
# Kernel 2: gate path (conv1d k=3 -> BN(train) -> ReLU -> conv1d k=1 ->
#           sigmoid), emitting scale = 1 + gate.  Lane-dense (B*T, C) layout,
#           single fused MXU matmul for the k=3 channel contraction.
# ------------------------------------------------------------------
def _gate_kernel(pooled_ref, w1_ref, b1_ref, gamma_ref, beta_ref,
                 w2_ref, b2_ref, scale_ref):
    # pooled_ref / scale_ref: (B, T, C) f32
    # w1_ref: (3*C, RC)   b1/gamma/beta: (1, RC)   w2_ref: (RC, C)   b2: (1, C)
    pooled = pooled_ref[...]
    B, T, C = pooled.shape

    # Temporal shifts for the k=3, padding=1 conv (zero-padded ends).
    zeros = jnp.zeros((B, 1, C), jnp.float32)
    prev = jnp.concatenate([zeros, pooled[:, :-1, :]], axis=1)   # pooled[t-1]
    nxt = jnp.concatenate([pooled[:, 1:, :], zeros], axis=1)     # pooled[t+1]

    # conv_reduce: one (B*T, 3C) @ (3C, RC) matmul instead of three push/pops.
    taps = jnp.concatenate([prev, pooled, nxt], axis=-1).reshape(B * T, 3 * C)
    z = jnp.dot(taps, w1_ref[...], preferred_element_type=jnp.float32)
    z = z + b1_ref[...]                                           # (B*T, RC)

    # BatchNorm1d, training mode: batch stats over (B, T), biased variance.
    mu = jnp.mean(z, axis=0, keepdims=True)
    var = jnp.mean((z - mu) ** 2, axis=0, keepdims=True)
    zn = (z - mu) * jax.lax.rsqrt(var + BN_EPS)
    y = jnp.maximum(gamma_ref[...] * zn + beta_ref[...], 0.0)     # ReLU

    # conv_process (k=1) + sigmoid; emit 1 + gate so the apply is one multiply.
    o = jnp.dot(y, w2_ref[...], preferred_element_type=jnp.float32) + b2_ref[...]
    scale_ref[...] = (1.0 + jax.nn.sigmoid(o)).reshape(B, T, C)


# ------------------------------------------------------------------
# Kernel 3: out = x * (1 + gate)
# ------------------------------------------------------------------
def _apply_kernel(x_ref, scale_ref, out_ref):
    # x_ref/out_ref: (1, tT, C, tHW)   scale_ref: (1, tT, C) f32
    scale = scale_ref[...].astype(x_ref.dtype)       # hoisted once per block
    out_ref[...] = x_ref[...] * scale[..., None]


# ------------------------------------------------------------------
# Wrapper
# ------------------------------------------------------------------
def tfam_forward(x, params):
    """x: (B, T, C, H, W) -> (B, T, C, H, W)."""
    B, T, C, H, W = x.shape
    HW = H * W
    RC = params["w1"].shape[0]
    itemsize = jnp.dtype(x.dtype).itemsize

    block_bytes, vmem_limit = _device_budgets()
    tile_T, tile_HW, pHW = _choose_tiles(T, C, HW, itemsize, block_bytes)

    # v7x megacore: make sure at least one *parallel* grid axis has >= 2 steps.
    if B * (T // tile_T) < 2 and T > 1 and tile_HW == HW:
        smaller = [d for d in range(1, T) if T % d == 0]
        nice = [d for d in smaller if d % 8 == 0]
        tile_T = max(nice) if nice else max(smaller)
    nT = T // tile_T
    nHW = pHW // tile_HW

    # Native layout: merge the trailing spatial dims (free reshape).
    xr = x.reshape(B, T, C, HW)
    if pHW != HW:
        # Rare fallback (HW split with no 128-aligned divisor): zero-pad lanes.
        # Exact for the pool (inv_hw uses the true HW; zero lanes add nothing)
        # and the padded output columns are sliced off below.
        xr = jnp.pad(xr, ((0, 0), (0, 0), (0, 0), (0, pHW - HW)))

    # --- 1) spatial average pool (f32 accumulation over the HW tiles) ---
    pooled = pl.pallas_call(
        functools.partial(_pool_kernel, inv_hw=1.0 / HW),
        out_shape=jax.ShapeDtypeStruct((B, T, C), jnp.float32),
        grid=(B, nT, nHW),
        in_specs=[pl.BlockSpec((1, tile_T, C, tile_HW),
                               lambda b, t, k: (b, t, 0, k))],
        out_specs=pl.BlockSpec((1, tile_T, C), lambda b, t, k: (b, t, 0)),
        scratch_shapes=[pltpu.VMEM((1, tile_T, C), jnp.float32)],
        compiler_params=pltpu.CompilerParams(
            dimension_semantics=("parallel", "parallel", "arbitrary"),
            vmem_limit_bytes=vmem_limit),
    )(xr)

    # --- 2) gate path (tiny: single invocation, whole arrays in VMEM) ---
    w1k = jnp.transpose(params["w1"], (2, 1, 0)).reshape(3 * C, RC)  # (3C, RC)
    b1k = params["b1"].reshape(1, RC)
    gk = params["gamma"].reshape(1, RC)
    bk = params["beta"].reshape(1, RC)
    w2k = jnp.transpose(params["w2"][:, :, 0])                       # (RC, C)
    b2k = params["b2"].reshape(1, C)

    vmem = functools.partial(pl.BlockSpec, memory_space=pltpu.MemorySpace.VMEM)
    scale = pl.pallas_call(
        _gate_kernel,
        out_shape=jax.ShapeDtypeStruct((B, T, C), jnp.float32),
        in_specs=[vmem()] * 7,
        out_specs=vmem(),
        compiler_params=pltpu.CompilerParams(vmem_limit_bytes=vmem_limit),
    )(pooled, w1k, b1k, gk, bk, w2k, b2k)

    # --- 3) out = x * (1 + gate), tiled & pipelined over (B, T, HW) ---
    # (Options, intentionally left off by default:
    #    input_output_aliases={0: 0}   -- in-place, saves an HBM allocation but
    #                                     donates x (useful on v5e's 16 GiB);
    #    pipeline_mode=pl.Buffered(3) on the x spec -- sweep only if xprof
    #                                     still shows exposed DMA.)
    out_r = pl.pallas_call(
        _apply_kernel,
        out_shape=jax.ShapeDtypeStruct((B, T, C, pHW), x.dtype),
        grid=(B, nT, nHW),
        in_specs=[
            pl.BlockSpec((1, tile_T, C, tile_HW), lambda b, t, k: (b, t, 0, k)),
            pl.BlockSpec((1, tile_T, C), lambda b, t, k: (b, t, 0)),
        ],
        out_specs=pl.BlockSpec((1, tile_T, C, tile_HW),
                               lambda b, t, k: (b, t, 0, k)),
        compiler_params=pltpu.CompilerParams(
            dimension_semantics=("parallel", "parallel", "parallel"),
            vmem_limit_bytes=vmem_limit),
    )(xr, scale)

    if pHW != HW:
        out_r = out_r[..., :HW]
    return out_r.reshape(B, T, C, H, W)   # free split of the trailing dim


# ------------------------------------------------------------------
# Pure-JAX reference (for correctness check)
# ------------------------------------------------------------------
def tfam_reference(x, params):
    B, T, C, H, W = x.shape
    xp = jnp.transpose(x, (0, 2, 1, 3, 4))            # (B, C, T, H, W)
    pooled = xp.mean(axis=(3, 4))                     # (B, C, T)

    z = jax.lax.conv_general_dilated(
        pooled, params["w1"], window_strides=(1,), padding=((1, 1),),
        dimension_numbers=("NCH", "OIH", "NCH"))
    z = z + params["b1"][None, :, None]

    mu = z.mean(axis=(0, 2), keepdims=True)
    var = ((z - mu) ** 2).mean(axis=(0, 2), keepdims=True)
    zn = (z - mu) / jnp.sqrt(var + BN_EPS)
    y = params["gamma"][None, :, None] * zn + params["beta"][None, :, None]
    y = jnp.maximum(y, 0.0)

    o = jax.lax.conv_general_dilated(
        y, params["w2"], window_strides=(1,), padding=((0, 0),),
        dimension_numbers=("NCH", "OIH", "NCH"))
    o = o + params["b2"][None, :, None]
    gate = jax.nn.sigmoid(o)                          # (B, C, T)

    out = xp * gate[..., None, None] + xp
    return jnp.transpose(out, (0, 2, 1, 3, 4))


def init_params(key, in_channels):
    rc = in_channels // REDUCTION
    k1, k2, k3, k4 = jax.random.split(key, 4)
    return {
        "w1": 0.1 * jax.random.normal(k1, (rc, in_channels, 3), jnp.float32),
        "b1": 0.05 * jax.random.normal(k2, (rc,), jnp.float32),
        "gamma": jnp.ones((rc,), jnp.float32),
        "beta": jnp.zeros((rc,), jnp.float32),
        "w2": 0.1 * jax.random.normal(k3, (in_channels, rc, 1), jnp.float32),
        "b2": 0.05 * jax.random.normal(k4, (in_channels,), jnp.float32),
    }


if __name__ == "__main__":
    B, T, C, H, W = 2, 8, 8, 16, 16          # x: (batch, time, channels, H, W)
    key = jax.random.PRNGKey(0)
    kx, kp = jax.random.split(key)
    x = jax.random.normal(kx, (B, T, C, H, W), jnp.float32)
    params = init_params(kp, C)

    out = jax.block_until_ready(jax.jit(tfam_forward)(x, params))
    ref = jax.block_until_ready(tfam_reference(x, params))

    assert out.shape == (B, T, C, H, W)
    np.testing.assert_allclose(np.asarray(out), np.asarray(ref),
                               rtol=1e-4, atol=1e-5)
    print("KERNEL_OK")
</pallas_src>

<mosaic_0001>
module attributes {stable_mosaic.version = 11 : i64} {
  func.func @_pool_kernel(%arg0: i32, %arg1: i32, %arg2: i32, %arg3: memref<1x8x8x256xf32, #tpu.memory_space<vmem>>, %arg4: memref<1x8x8xf32, #tpu.memory_space<vmem>>, %arg5: memref<1x8x8xf32, #tpu.memory_space<vmem>>) attributes {dimension_semantics = [#tpu.dimension_semantics<parallel>, #tpu.dimension_semantics<parallel>, #tpu.dimension_semantics<arbitrary>], iteration_bounds = array<i64: 2, 1, 1>, scalar_prefetch = 0 : i64, scratch_operands = 1 : i64, tpu.core_type = #tpu.core_type<tc>, window_params = [{transform_indices = @transform_0, window_bounds = array<i64: 1, 8, 8, 256>}, {transform_indices = @transform_1, window_bounds = array<i64: 1, 8, 8>}]} {
    %c0_i32 = arith.constant 0 : i32
    %0 = arith.cmpi eq, %arg2, %c0_i32 : i32
    %1 = arith.extui %0 : i1 to i32
    %c0_i32_0 = arith.constant 0 : i32
    %2 = arith.cmpi ne, %1, %c0_i32_0 : i32
    scf.if %2 {
      %cst_12 = arith.constant 0.000000e+00 : f32
      %11 = vector.broadcast %cst_12 : f32 to vector<1x8x8xf32>
      %c0_13 = arith.constant 0 : index
      %c0_14 = arith.constant 0 : index
      %c0_15 = arith.constant 0 : index
      %12 = vector.load %arg5[%c0_13, %c0_14, %c0_15] : memref<1x8x8xf32, #tpu.memory_space<vmem>>, vector<1x8x8xf32>
      tpu.vector_store %arg5[%c0_13, %c0_14, %c0_15], %11 {strides = array<i32>} : memref<1x8x8xf32, #tpu.memory_space<vmem>>, vector<1x8x8xf32>,
    } else {
    }
    %c0 = arith.constant 0 : index
    %c0_1 = arith.constant 0 : index
    %c0_2 = arith.constant 0 : index
    %3 = vector.load %arg5[%c0, %c0_1, %c0_2] : memref<1x8x8xf32, #tpu.memory_space<vmem>>, vector<1x8x8xf32>
    %c0_3 = arith.constant 0 : index
    %c0_4 = arith.constant 0 : index
    %c0_5 = arith.constant 0 : index
    %c0_6 = arith.constant 0 : index
    %4 = vector.load %arg3[%c0_3, %c0_4, %c0_5, %c0_6] : memref<1x8x8x256xf32, #tpu.memory_space<vmem>>, vector<1x8x8x256xf32>
    %cst = arith.constant dense<0.000000e+00> : vector<1x8x8xf32>
    %5 = vector.multi_reduction <add>, %4, %cst [3] : vector<1x8x8x256xf32> to vector<1x8x8xf32>
    %6 = arith.addf %3, %5 : vector<1x8x8xf32>
    %c0_7 = arith.constant 0 : index
    %c0_8 = arith.constant 0 : index
    %c0_9 = arith.constant 0 : index
    %7 = vector.load %arg5[%c0_7, %c0_8, %c0_9] : memref<1x8x8xf32, #tpu.memory_space<vmem>>, vector<1x8x8xf32>
    tpu.vector_store %arg5[%c0_7, %c0_8, %c0_9], %6 {strides = array<i32>} : memref<1x8x8xf32, #tpu.memory_space<vmem>>, vector<1x8x8xf32>,
    %c0_i32_10 = arith.constant 0 : i32
    %8 = arith.cmpi eq, %arg2, %c0_i32_10 : i32
    %9 = arith.extui %8 : i1 to i32
    %c0_i32_11 = arith.constant 0 : i32
    %10 = arith.cmpi ne, %9, %c0_i32_11 : i32
    scf.if %10 {
      %c0_12 = arith.constant 0 : index
      %c0_13 = arith.constant 0 : index
      %c0_14 = arith.constant 0 : index
      %11 = vector.load %arg5[%c0_12, %c0_13, %c0_14] : memref<1x8x8xf32, #tpu.memory_space<vmem>>, vector<1x8x8xf32>
      %cst_15 = arith.constant 3.906250e-03 : f32
      %12 = vector.broadcast %cst_15 : f32 to vector<1x8x8xf32>
      %13 = arith.mulf %11, %12 : vector<1x8x8xf32>
      %c0_16 = arith.constant 0 : index
      %c0_17 = arith.constant 0 : index
      %c0_18 = arith.constant 0 : index
      %14 = vector.load %arg4[%c0_16, %c0_17, %c0_18] : memref<1x8x8xf32, #tpu.memory_space<vmem>>, vector<1x8x8xf32>
      tpu.vector_store %arg4[%c0_16, %c0_17, %c0_18], %13 {strides = array<i32>} : memref<1x8x8xf32, #tpu.memory_space<vmem>>, vector<1x8x8xf32>,
    } else {
    }
    return
  }
  func.func @transform_0(%arg0: i32, %arg1: i32, %arg2: i32) -> (i32, i32, i32, i32) {
    %c0_i32 = arith.constant 0 : i32
    %c0_i32_0 = arith.constant 0 : i32
    return %arg0, %arg1, %c0_i32, %arg2 : i32, i32, i32, i32
  }
  func.func @transform_1(%arg0: i32, %arg1: i32, %arg2: i32) -> (i32, i32, i32) {
    %c0_i32 = arith.constant 0 : i32
    %c0_i32_0 = arith.constant 0 : i32
    return %arg0, %arg1, %c0_i32 : i32, i32, i32
  }
}

module attributes {stable_mosaic.version = 11 : i64} {
  func.func @_gate_kernel(%arg0: memref<2x8x8xf32, #tpu.memory_space<vmem>>, %arg1: memref<24x2xf32, #tpu.memory_space<vmem>>, %arg2: memref<1x2xf32, #tpu.memory_space<vmem>>, %arg3: memref<1x2xf32, #tpu.memory_space<vmem>>, %arg4: memref<1x2xf32, #tpu.memory_space<vmem>>, %arg5: memref<2x8xf32, #tpu.memory_space<vmem>>, %arg6: memref<1x8xf32, #tpu.memory_space<vmem>>, %arg7: memref<2x8x8xf32, #tpu.memory_space<vmem>>) attributes {dimension_semantics = [], scalar_prefetch = 0 : i64, scratch_operands = 0 : i64, tpu.core_type = #tpu.core_type<tc>} {
    %c0 = arith.constant 0 : index
    %c0_0 = arith.constant 0 : index
    %c0_1 = arith.constant 0 : index
    %0 = vector.load %arg0[%c0, %c0_0, %c0_1] : memref<2x8x8xf32, #tpu.memory_space<vmem>>, vector<2x8x8xf32>
    %cst = arith.constant 0.000000e+00 : f32
    %1 = vector.broadcast %cst : f32 to vector<2x1x8xf32>
    %2 = vector.extract_strided_slice %0 {offsets = [0, 0, 0], sizes = [2, 7, 8], strides = [1, 1, 1]} : vector<2x8x8xf32> to vector<2x7x8xf32>
    %3 = tpu.concatenate %1, %2 in 1 : vector<2x1x8xf32>, vector<2x7x8xf32> -> vector<2x8x8xf32>
    %4 = vector.extract_strided_slice %0 {offsets = [0, 1, 0], sizes = [2, 7, 8], strides = [1, 1, 1]} : vector<2x8x8xf32> to vector<2x7x8xf32>
    %5 = tpu.concatenate %4, %1 in 1 : vector<2x7x8xf32>, vector<2x1x8xf32> -> vector<2x8x8xf32>
    %6 = tpu.concatenate %3, %0, %5 in 2 : vector<2x8x8xf32>, vector<2x8x8xf32>, vector<2x8x8xf32> -> vector<2x8x24xf32>
    %7 = vector.shape_cast %6 : vector<2x8x24xf32> to vector<16x24xf32>
    %c0_2 = arith.constant 0 : index
    %c0_3 = arith.constant 0 : index
    %8 = vector.load %arg1[%c0_2, %c0_3] : memref<24x2xf32, #tpu.memory_space<vmem>>, vector<24x2xf32>
    %cst_4 = arith.constant dense<0.000000e+00> : vector<16x2xf32>
    %9 = tpu.matmul %7, %8, %cst_4 {dimension_numbers = #tpu.dot_dimension_numbers<[1], [0], [0], [1], [0, 0, 1, 1], [], []>} : vector<16x24xf32>, vector<24x2xf32>, vector<16x2xf32> -> vector<16x2xf32>
    %c0_5 = arith.constant 0 : index
    %c0_6 = arith.constant 0 : index
    %10 = vector.load %arg2[%c0_5, %c0_6] : memref<1x2xf32, #tpu.memory_space<vmem>>, vector<1x2xf32>
    %11 = vector.broadcast %10 : vector<1x2xf32> to vector<16x2xf32>
    %12 = arith.addf %9, %11 : vector<16x2xf32>
    %cst_7 = arith.constant dense<0.000000e+00> : vector<2xf32>
    %13 = vector.multi_reduction <add>, %12, %cst_7 [0] : vector<16x2xf32> to vector<2xf32>
    %14 = vector.shape_cast %13 : vector<2xf32> to vector<1x2xf32>
    %cst_8 = arith.constant 1.600000e+01 : f32
    %15 = vector.broadcast %cst_8 : f32 to vector<1x2xf32>
    %16 = arith.divf %14, %15 : vector<1x2xf32>
    %17 = vector.broadcast %16 : vector<1x2xf32> to vector<16x2xf32>
    %18 = arith.subf %12, %17 : vector<16x2xf32>
    %19 = arith.mulf %18, %18 : vector<16x2xf32>
    %cst_9 = arith.constant dense<0.000000e+00> : vector<2xf32>
    %20 = vector.multi_reduction <add>, %19, %cst_9 [0] : vector<16x2xf32> to vector<2xf32>
    %21 = vector.shape_cast %20 : vector<2xf32> to vector<1x2xf32>
    %cst_10 = arith.constant 1.600000e+01 : f32
    %22 = vector.broadcast %cst_10 : f32 to vector<1x2xf32>
    %23 = arith.divf %21, %22 : vector<1x2xf32>
    %24 = vector.broadcast %16 : vector<1x2xf32> to vector<16x2xf32>
    %25 = arith.subf %12, %24 : vector<16x2xf32>
    %cst_11 = arith.constant 9.99999974E-6 : f32
    %26 = vector.broadcast %cst_11 : f32 to vector<1x2xf32>
    %27 = arith.addf %23, %26 : vector<1x2xf32>
    %28 = math.rsqrt %27 : vector<1x2xf32>
    %29 = vector.broadcast %28 : vector<1x2xf32> to vector<16x2xf32>
    %30 = arith.mulf %25, %29 : vector<16x2xf32>
    %c0_12 = arith.constant 0 : index
    %c0_13 = arith.constant 0 : index
    %31 = vector.load %arg3[%c0_12, %c0_13] : memref<1x2xf32, #tpu.memory_space<vmem>>, vector<1x2xf32>
    %32 = vector.broadcast %31 : vector<1x2xf32> to vector<16x2xf32>
    %33 = arith.mulf %32, %30 : vector<16x2xf32>
    %c0_14 = arith.constant 0 : index
    %c0_15 = arith.constant 0 : index
    %34 = vector.load %arg4[%c0_14, %c0_15] : memref<1x2xf32, #tpu.memory_space<vmem>>, vector<1x2xf32>
    %35 = vector.broadcast %34 : vector<1x2xf32> to vector<16x2xf32>
    %36 = arith.addf %33, %35 : vector<16x2xf32>
    %cst_16 = arith.constant 0.000000e+00 : f32
    %37 = vector.broadcast %cst_16 : f32 to vector<16x2xf32>
    %38 = arith.maximumf %36, %37 : vector<16x2xf32>
    %c0_17 = arith.constant 0 : index
    %c0_18 = arith.constant 0 : index
    %39 = vector.load %arg5[%c0_17, %c0_18] : memref<2x8xf32, #tpu.memory_space<vmem>>, vector<2x8xf32>
    %cst_19 = arith.constant dense<0.000000e+00> : vector<16x8xf32>
    %40 = tpu.matmul %38, %39, %cst_19 {dimension_numbers = #tpu.dot_dimension_numbers<[1], [0], [0], [1], [0, 0, 1, 1], [], []>} : vector<16x2xf32>, vector<2x8xf32>, vector<16x8xf32> -> vector<16x8xf32>
    %c0_20 = arith.constant 0 : index
    %c0_21 = arith.constant 0 : index
    %41 = vector.load %arg6[%c0_20, %c0_21] : memref<1x8xf32, #tpu.memory_space<vmem>>, vector<1x8xf32>
    %42 = vector.broadcast %41 : vector<1x8xf32> to vector<16x8xf32>
    %43 = arith.addf %40, %42 : vector<16x8xf32>
    %44 = arith.negf %43 : vector<16x8xf32>
    %45 = math.exp %44 : vector<16x8xf32>
    %cst_22 = arith.constant 1.000000e+00 : f32
    %46 = vector.broadcast %cst_22 : f32 to vector<16x8xf32>
    %47 = arith.addf %46, %45 : vector<16x8xf32>
    %48 = arith.divf %46, %47 : vector<16x8xf32>
    %cst_23 = arith.constant 1.000000e+00 : f32
    %49 = vector.broadcast %cst_23 : f32 to vector<16x8xf32>
    %50 = arith.addf %49, %48 : vector<16x8xf32>
    %51 = vector.shape_cast %50 : vector<16x8xf32> to vector<2x8x8xf32>
    %c0_24 = arith.constant 0 : index
    %c0_25 = arith.constant 0 : index
    %c0_26 = arith.constant 0 : index
    %52 = vector.load %arg7[%c0_24, %c0_25, %c0_26] : memref<2x8x8xf32, #tpu.memory_space<vmem>>, vector<2x8x8xf32>
    tpu.vector_store %arg7[%c0_24, %c0_25, %c0_26], %51 {strides = array<i32>} : memref<2x8x8xf32, #tpu.memory_space<vmem>>, vector<2x8x8xf32>,
    return
  }
}

module attributes {stable_mosaic.version = 11 : i64} {
  func.func @_apply_kernel(%arg0: i32, %arg1: i32, %arg2: i32, %arg3: memref<1x8x8x256xf32, #tpu.memory_space<vmem>>, %arg4: memref<1x8x8xf32, #tpu.memory_space<vmem>>, %arg5: memref<1x8x8x256xf32, #tpu.memory_space<vmem>>) attributes {dimension_semantics = [#tpu.dimension_semantics<parallel>, #tpu.dimension_semantics<parallel>, #tpu.dimension_semantics<parallel>], iteration_bounds = array<i64: 2, 1, 1>, scalar_prefetch = 0 : i64, scratch_operands = 0 : i64, tpu.core_type = #tpu.core_type<tc>, window_params = [{transform_indices = @transform_0, window_bounds = array<i64: 1, 8, 8, 256>}, {transform_indices = @transform_1, window_bounds = array<i64: 1, 8, 8>}, {transform_indices = @transform_2, window_bounds = array<i64: 1, 8, 8, 256>}]} {
    %c0 = arith.constant 0 : index
    %c0_0 = arith.constant 0 : index
    %c0_1 = arith.constant 0 : index
    %0 = vector.load %arg4[%c0, %c0_0, %c0_1] : memref<1x8x8xf32, #tpu.memory_space<vmem>>, vector<1x8x8xf32>
    %c0_2 = arith.constant 0 : index
    %c0_3 = arith.constant 0 : index
    %c0_4 = arith.constant 0 : index
    %c0_5 = arith.constant 0 : index
    %1 = vector.load %arg3[%c0_2, %c0_3, %c0_4, %c0_5] : memref<1x8x8x256xf32, #tpu.memory_space<vmem>>, vector<1x8x8x256xf32>
    %2 = vector.shape_cast %0 : vector<1x8x8xf32> to vector<1x8x8x1xf32>
    %3 = vector.broadcast %2 : vector<1x8x8x1xf32> to vector<1x8x8x256xf32>
    %4 = arith.mulf %1, %3 : vector<1x8x8x256xf32>
    %c0_6 = arith.constant 0 : index
    %c0_7 = arith.constant 0 : index
    %c0_8 = arith.constant 0 : index
    %c0_9 = arith.constant 0 : index
    %5 = vector.load %arg5[%c0_6, %c0_7, %c0_8, %c0_9] : memref<1x8x8x256xf32, #tpu.memory_space<vmem>>, vector<1x8x8x256xf32>
    tpu.vector_store %arg5[%c0_6, %c0_7, %c0_8, %c0_9], %4 {strides = array<i32>} : memref<1x8x8x256xf32, #tpu.memory_space<vmem>>, vector<1x8x8x256xf32>,
    return
  }
  func.func @transform_0(%arg0: i32, %arg1: i32, %arg2: i32) -> (i32, i32, i32, i32) {
    %c0_i32 = arith.constant 0 : i32
    %c0_i32_0 = arith.constant 0 : i32
    return %arg0, %arg1, %c0_i32, %arg2 : i32, i32, i32, i32
  }
  func.func @transform_1(%arg0: i32, %arg1: i32, %arg2: i32) -> (i32, i32, i32) {
    %c0_i32 = arith.constant 0 : i32
    %c0_i32_0 = arith.constant 0 : i32
    return %arg0, %arg1, %c0_i32 : i32, i32, i32
  }
  func.func @transform_2(%arg0: i32, %arg1: i32, %arg2: i32) -> (i32, i32, i32, i32) {
    %c0_i32 = arith.constant 0 : i32
    %c0_i32_0 = arith.constant 0 : i32
    return %arg0, %arg1, %c0_i32, %arg2 : i32, i32, i32, i32
  }
}

</mosaic_0001>

<llo_original>
// kernel: tfam_forward.3
$region0: #{tfam_forward.3}
  #allocation0 [shape = 'u32[]', space=smem, size = 0x4, offset = 0x4, fixed_abs, tag = 'smem constant byte address 0x4 - core index']
  #allocation1 [shape = 'u32[144,128]{1,0:T(1,128)}', space=vmem, size = 0x12000, scoped, tag = 'internal scratch']
  #allocation2 [shape = 'f32[1,8,8]{2,1,0:T(8,128)}', space=vmem, size = 0x1000, scoped, tag = 'scratch operand']
  %s0 = inlined_call_operand.vmem [shape: f32[2,8,8,256], index: 0, kind: input, shape index: {}]
  %s1 = inlined_call_operand.vmem [shape: f32[2,8,8], index: 1, kind: output, shape index: {}]
  %s2 = sld [smem:[#allocation0]]
  $region45: #{tfam_forward.3} parent=0
    _
  %s4 = ssub.s32 1, %s2
  %s5 = scalar_select 0, %s4, %s2
  loop: start=0, step=1, limit=4
  $region2: #{tfam_forward.3} parent=0 // loop_pre_header
    _
  $region3: #{tfam_forward.3} parent=0 // loop_header
    %s7 = sphi 0, %s11
    %p8 = scmp.ge.s32.totalorder %s7, 4
    %s14 = sphi 0, %s33
    %s15 = sphi 0, %s29
    %s16 = sphi 0, %s25
    %s17 = sphi 0, %s14
    %s18 = sphi 0, %s15
    %s19 = sphi 0, %s16
    %s20 = sphi 0, %s17
    %s21 = sphi 0, %s18
    %s22 = sphi 0, %s19
    %s40 = sphi 0, %s42
    %s43 = sphi 0, %s40
    %s44 = sphi 0, %s43
    %s60 = sphi 0, %s44
    %s68 = sphi 0, %s70
    %s71 = sphi 0, %s68
    %s72 = sphi 0, %s71
    %s88 = sphi 0, %s72
  $region4: #{tfam_forward.3} parent=0 // loop_header_branch
    %10 = sbr.rel (%p8) target = $region8
  $region5: #{tfam_forward.3} parent=0 // loop_body
    %s12 = ssub.s32 %s7, 1
    %s13 = ssub.s32 %s7, 2
    %s23 = sadd.s32 1, %s16
    %p24 = scmp.ge.s32.totalorder %s23, 1
    %s25 = scalar_select %p24, 0, %s23
    %s26 = sadd.s32 1, %s15
    %s27 = scalar_select %p24, %s26, %s15
    %p28 = scmp.ge.s32.totalorder %s27, 1
    %s29 = scalar_select %p28, 0, %s27
    %s30 = sadd.s32 1, %s14
    %s31 = scalar_select %p28, %s30, %s14
    %p32 = scmp.ge.s32.totalorder %s31, 2
    %s33 = scalar_select %p32, 0, %s31
    %s34 = ssub.s32 %s14, %s33
    %s35 = ssub.s32 %s15, %s29
    %s36 = sor.u32 %s34, %s35
    %s37 = ssub.s32 %s16, %s25
    %s38 = sor.u32 %s36, %s37
    %p39 = scmp.eq.s32.totalorder %s38, 0
    %s41 = sadd.s32 %s40, 1
    %s42 = scalar_select %p39, %s40, %s41
    %p45 = pneg %p39
    %p46 = scmp.eq.s32.totalorder %s7, 1
    %p47 = por %p45, %p46
    %p48 = scmp.ne.s32.totalorder %s40, %s43
    %p49 = scmp.eq.s32.totalorder %s7, 0
    %p50 = por %p48, %p49
    %p51 = scmp.ne.s32.totalorder %s40, %s43
    %p52 = scmp.eq.s32.totalorder %s12, 1
    %p53 = por %p51, %p52
    %p54 = scmp.ne.s32.totalorder %s43, %s44
    %p55 = scmp.eq.s32.totalorder %s12, 0
    %p56 = por %p54, %p55
    %p57 = scmp.ne.s32.totalorder %s43, %s44
    %p58 = scmp.eq.s32.totalorder %s13, 1
    %p59 = por %p57, %p58
    %p61 = scmp.ne.s32.totalorder %s44, %s60
    %p62 = scmp.eq.s32.totalorder %s13, 0
    %p63 = por %p61, %p62
    %s64 = ssub.s32 %s14, %s33
    %s65 = ssub.s32 %s15, %s29
    %s66 = sor.u32 %s64, %s65
    %p67 = scmp.eq.s32.totalorder %s66, 0
    %s69 = sadd.s32 %s68, 1
    %s70 = scalar_select %p67, %s68, %s69
    %p73 = pneg %p67
    %p74 = scmp.eq.s32.totalorder %s7, 1
    %p75 = por %p73, %p74
    %p76 = scmp.ne.s32.totalorder %s68, %s71
    %p77 = scmp.eq.s32.totalorder %s7, 0
    %p78 = por %p76, %p77
    %p79 = scmp.ne.s32.totalorder %s68, %s71
    %p80 = scmp.eq.s32.totalorder %s12, 1
    %p81 = por %p79, %p80
    %p82 = scmp.ne.s32.totalorder %s71, %s72
    %p83 = scmp.eq.s32.totalorder %s12, 0
    %p84 = por %p82, %p83
    %p85 = scmp.ne.s32.totalorder %s71, %s72
    %p86 = scmp.eq.s32.totalorder %s13, 1
    %p87 = por %p85, %p86
    %p89 = scmp.ne.s32.totalorder %s72, %s88
    %p90 = scmp.eq.s32.totalorder %s13, 0
    %p91 = por %p89, %p90
    %p92 = scmp.le.s32.totalorder 1, %s7
    %p93 = scmp.lt.s32.totalorder %s7, 3
    %p94 = pnand %p92, %p93
    %p95 = pneg %p94
    // Predicated region
    $region9: #{tfam_forward.3} parent=5 // pred_check
      _
    $region10: #{tfam_forward.3} parent=5 // pred_check_branch
      %97 = sbr.rel (%p94) target = $region12
    $region11: #{tfam_forward.3} parent=5 // pred_region
      %s98 = ssub.s32 %s7, 1
    $region12: #{tfam_forward.3} parent=5 // pred_fallthru
      _
    %p99 = scmp.lt.s32.totalorder %s7, 2
    // Predicated region
    $region13: #{tfam_forward.3} parent=5 // pred_check
      %p100 = pneg %p99
    $region14: #{tfam_forward.3} parent=5 // pred_check_branch
      %102 = sbr.rel (%p100) target = $region16
    $region15: #{tfam_forward.3} parent=5 // pred_region
      // Predicated region
      $region17: #{tfam_forward.3} parent=15 // pred_check
        %p103 = pneg %p50
      $region18: #{tfam_forward.3} parent=15 // pred_check_branch
        %105 = sbr.rel (%p103) target = $region20
      $region19: #{tfam_forward.3} parent=15 // pred_region
        %s106 = smul.u32 8, %s15
        %s107 = smul.u32 2, %s16
        %p108 = scmp.lt.s32.totalorder %s14, 1
        %s109 = scalar_select %p108, %s14, 1
        %p110 = scmp.lt.s32.totalorder %s106, 7
        %s111 = scalar_select %p110, %s106, 7
        %p112 = scmp.lt.s32.totalorder %s107, 1
        %s113 = scalar_select %p112, %s107, 1
        %s114 = smul.addr %s111, 2
        %s115 = sadd.s32 %s113, %s114
        %s116 = smul.addr %s109, 16
        %s117 = sadd.s32 %s115, %s116
        %s118 = smul.addr %s117, 8
        %s119 = scalar_lea.vmem %s0, %s118
        %s120 = smul.u32 8, %s15
        %s121 = smul.u32 2, %s16
      $region20: #{tfam_forward.3} parent=15 // pred_fallthru
        _
    $region16: #{tfam_forward.3} parent=5 // pred_fallthru
      _
    %p122 = scmp.le.s32.totalorder 1, %s7
    %p123 = scmp.lt.s32.totalorder %s7, 3
    %p124 = pnand %p122, %p123
    %p125 = pneg %p124
    // Predicated region
    $region21: #{tfam_forward.3} parent=5 // pred_check
      _
    $region22: #{tfam_forward.3} parent=5 // pred_check_branch
      %127 = sbr.rel (%p124) target = $region24
    $region23: #{tfam_forward.3} parent=5 // pred_region
      %s128 = ssub.s32 %s7, 1
      %s129 = smul.u32 8, %s18
      %s130 = smul.u32 2, %s19
      %p131 = scmp.lt.s32.totalorder %s17, 1
      %s132 = scalar_select %p131, %s17, 1
      %p133 = scmp.lt.s32.totalorder %s129, 7
      %s134 = scalar_select %p133, %s129, 7
      %p135 = scmp.lt.s32.totalorder %s130, 1
      %s136 = scalar_select %p135, %s130, 1
      %s137 = smul.addr %s134, 2
      %s138 = sadd.s32 %s136, %s137
      %s139 = smul.addr %s132, 16
      %s140 = sadd.s32 %s138, %s139
      %s141 = smul.addr %s140, 8
      %s142 = scalar_lea.vmem %s0, %s141
      %p143 = pneg %p56
      %p144 = pneg %p53
      %p145 = pneg %p84
      %p146 = pneg %p81
      %p147 = scmp.lt.s32.totalorder %s17, 1
      %s148 = scalar_select %p147, %s17, 1
      %p149 = scmp.lt.s32.totalorder %s18, 0
      %s150 = scalar_select %p149, %s18, 0
      %s151 = sadd.s32 %s150, %s148
      %s152 = smul.addr %s151, 8
      %s153 = scalar_lea.vmem %s1, %s152
      %s154 = smul.u32 8, %s18
      %s155 = smul.u32 2, %s19
      %p156 = scmp.lt.s32.totalorder %s17, 1
      %s157 = scalar_select %p156, %s17, 1
      %p158 = scmp.lt.s32.totalorder %s154, 7
      %s159 = scalar_select %p158, %s154, 7
      %p160 = scmp.lt.s32.totalorder %s155, 1
      %s161 = scalar_select %p160, %s155, 1
      %s162 = smul.addr %s159, 2
      %s163 = sadd.s32 %s161, %s162
      %s164 = smul.addr %s157, 16
      %s165 = sadd.s32 %s163, %s164
      %s166 = smul.addr %s165, 8
      %s167 = scalar_lea.vmem %s0, %s166
      %s168 = smul.u32 8, %s18
      %s169 = smul.u32 2, %s19
      %p170 = scmp.lt.s32.totalorder %s17, 1
      %s171 = scalar_select %p170, %s17, 1
      %p172 = scmp.lt.s32.totalorder %s18, 0
      %s173 = scalar_select %p172, %s18, 0
      %s174 = sadd.s32 %s173, %s171
      %s175 = smul.addr %s174, 8
      %s176 = scalar_lea.vmem %s1, %s175
      %p177 = scmp.eq.s32.totalorder %s19, 0
      // Predicated region
      $region25: #{tfam_forward.3} parent=23 // pred_check
        %p178 = pneg %p177
      $region26: #{tfam_forward.3} parent=23 // pred_check_branch
        %180 = sbr.rel (%p178) target = $region28
      $region27: #{tfam_forward.3} parent=23 // pred_region
        %vm181 = vcmask 64512
        %182 = vst.msk [vmem:[#allocation2] sm:$0xff] %vm181, 0.0
      $region28: #{tfam_forward.3} parent=23 // pred_fallthru
        _
      %v183 = vld [vmem:[#allocation2] sm:$0xff]
      %v184 = vld [vmem:[%s167] sm:$0xff]
      %v185 = vld [vmem:[%s167 + $0x8] sm:$0xff]
      %v186 = vld [vmem:[%s167 + $0x10] sm:$0xff]
      %v187 = vld [vmem:[%s167 + $0x18] sm:$0xff]
      %v188 = vld [vmem:[%s167 + $0x20] sm:$0xff]
      %v189 = vld [vmem:[%s167 + $0x28] sm:$0xff]
      %v190 = vld [vmem:[%s167 + $0x30] sm:$0xff]
      %v191 = vld [vmem:[%s167 + $0x38] sm:$0xff]
      %v192 = vld [vmem:[%s167 + $0x40] sm:$0xff]
      %v193 = vld [vmem:[%s167 + $0x48] sm:$0xff]
      %v194 = vld [vmem:[%s167 + $0x50] sm:$0xff]
      %v195 = vld [vmem:[%s167 + $0x58] sm:$0xff]
      %v196 = vld [vmem:[%s167 + $0x60] sm:$0xff]
      %v197 = vld [vmem:[%s167 + $0x68] sm:$0xff]
      %v198 = vld [vmem:[%s167 + $0x70] sm:$0xff]
      %v199 = vld [vmem:[%s167 + $0x78] sm:$0xff]
      %v200 = vadd.f32 %v184, %v185
      %201 = vadd.xlane.f32.xlu0 %v200
      %v202 = vpop.xlane.xlu0 %201
      %v203 = vadd.f32 %v186, %v187
      %204 = vadd.xlane.f32.xlu0 %v203
      %v205 = vpop.xlane.xlu0 %204
      %v206 = vadd.f32 %v188, %v189
      %207 = vadd.xlane.f32.xlu0 %v206
      %v208 = vpop.xlane.xlu0 %207
      %v209 = vadd.f32 %v190, %v191
      %210 = vadd.xlane.f32.xlu0 %v209
      %v211 = vpop.xlane.xlu0 %210
      %v212 = vadd.f32 %v192, %v193
      %213 = vadd.xlane.f32.xlu0 %v212
      %v214 = vpop.xlane.xlu0 %213
      %v215 = vadd.f32 %v194, %v195
      %216 = vadd.xlane.f32.xlu0 %v215
      %v217 = vpop.xlane.xlu0 %216
      %v218 = vadd.f32 %v196, %v197
      %219 = vadd.xlane.f32.xlu0 %v218
      %v220 = vpop.xlane.xlu0 %219
      %v221 = vadd.f32 %v198, %v199
      %222 = vadd.xlane.f32.xlu0 %v221
      %v223 = vpop.xlane.xlu0 %222
      %v232 = vlaneseq
      %v233 = vand.u32 %v232, 127
      %v234 = vlaneseq
      %v235 = vshrl.u32 %v234, 7
      %v236 = vsub.s32 %v233, %v235
      %v237 = vrot.slane %v202, %v236
      %v238 = vlaneseq
      %v239 = vshrl.u32 %v238, 7
      %v240 = vsub.s32 %v233, %v239
      %v241 = vrot.slane %v205, %v240
      %v242 = vlaneseq
      %v243 = vshrl.u32 %v242, 7
      %v244 = vsub.s32 %v233, %v243
      %v245 = vrot.slane %v208, %v244
      %v246 = vlaneseq
      %v247 = vshrl.u32 %v246, 7
      %v248 = vsub.s32 %v233, %v247
      %v249 = vrot.slane %v211, %v248
      %v250 = vlaneseq
      %v251 = vshrl.u32 %v250, 7
      %v252 = vsub.s32 %v233, %v251
      %v253 = vrot.slane %v214, %v252
      %v254 = vlaneseq
      %v255 = vshrl.u32 %v254, 7
      %v256 = vsub.s32 %v233, %v255
      %v257 = vrot.slane %v217, %v256
      %v258 = vlaneseq
      %v259 = vshrl.u32 %v258, 7
      %v260 = vsub.s32 %v233, %v259
      %v261 = vrot.slane %v220, %v260
      %v262 = vlaneseq
      %v263 = vshrl.u32 %v262, 7
      %v264 = vsub.s32 %v233, %v263
      %v265 = vrot.slane %v223, %v264
      %vm266 = vcmask 1041409
      %v267 = vsel %vm266, %v241, %v237
      %vm268 = vcmask 1042434
      %v269 = vsel %vm268, %v245, %v267
      %vm270 = vcmask 1043459
      %v271 = vsel %vm270, %v249, %v269
      %vm272 = vcmask 1044484
      %v273 = vsel %vm272, %v253, %v271
      %vm274 = vcmask 1045509
      %v275 = vsel %vm274, %v257, %v273
      %vm276 = vcmask 1046534
      %v277 = vsel %vm276, %v261, %v275
      %vm278 = vcmask 1047559
      %v279 = vsel %vm278, %v265, %v277
      %v281 = vadd.f32 %v183, %v279
      %vm282 = vcmask 64512
      %283 = vst.msk [vmem:[#allocation2] sm:$0xff] %vm282, %v281
      // Predicated region
      $region29: #{tfam_forward.3} parent=23 // pred_check
        %p284 = pneg %p177
      $region30: #{tfam_forward.3} parent=23 // pred_check_branch
        %286 = sbr.rel (%p284) target = $region32
      $region31: #{tfam_forward.3} parent=23 // pred_region
        %v287 = vld [vmem:[#allocation2] sm:$0xff]
        %v288 = vmul.f32 %v287, 0.00390625
        %289 = vst.msk [vmem:[%s176] sm:$0xff] %vm282, %v288
      $region32: #{tfam_forward.3} parent=23 // pred_fallthru
        _
      %p290 = scmp.lt.s32.totalorder %s17, 1
      %s291 = scalar_select %p290, %s17, 1
      %p292 = scmp.lt.s32.totalorder %s18, 0
      %s293 = scalar_select %p292, %s18, 0
      %s294 = sadd.s32 %s293, %s291
      %s295 = smul.addr %s294, 8
      %s296 = scalar_lea.vmem %s1, %s295
      // Predicated region
      $region33: #{tfam_forward.3} parent=23 // pred_check
        %p297 = pneg %p81
      $region34: #{tfam_forward.3} parent=23 // pred_check_branch
        %299 = sbr.rel (%p297) target = $region36
      $region35: #{tfam_forward.3} parent=23 // pred_region
        _
      $region36: #{tfam_forward.3} parent=23 // pred_fallthru
        _
    $region24: #{tfam_forward.3} parent=5 // pred_fallthru
      _
    %p300 = scmp.le.s32.totalorder 2, %s7
    // Predicated region
    $region37: #{tfam_forward.3} parent=5 // pred_check
      %p301 = pneg %p300
    $region38: #{tfam_forward.3} parent=5 // pred_check_branch
      %303 = sbr.rel (%p301) target = $region40
    $region39: #{tfam_forward.3} parent=5 // pred_region
      %s304 = ssub.s32 %s7, 2
      // Predicated region
      $region41: #{tfam_forward.3} parent=39 // pred_check
        %p305 = pneg %p87
      $region42: #{tfam_forward.3} parent=39 // pred_check_branch
        %307 = sbr.rel (%p305) target = $region44
      $region43: #{tfam_forward.3} parent=39 // pred_region
        %p308 = scmp.lt.s32.totalorder %s20, 1
        %s309 = scalar_select %p308, %s20, 1
        %p310 = scmp.lt.s32.totalorder %s21, 0
        %s311 = scalar_select %p310, %s21, 0
        %s312 = sadd.s32 %s311, %s309
        %s313 = smul.addr %s312, 8
        %s314 = scalar_lea.vmem %s1, %s313
      $region44: #{tfam_forward.3} parent=39 // pred_fallthru
        _
    $region40: #{tfam_forward.3} parent=5 // pred_fallthru
      _
  $region6: #{tfam_forward.3} parent=0 // loop_footer
    %s11 = sadd.s32 1, %s7
  $region7: #{tfam_forward.3} parent=0 // loop_footer_branch
    %6 = sbr.rel target = $region3
  $region8: #{tfam_forward.3} parent=0 // loop_exit
    _

// kernel: tfam_forward.4
$region0: #{tfam_forward.4}
  #allocation0 [shape = 'u32[]', space=smem, size = 0x4, offset = 0x4, fixed_abs, tag = 'smem constant byte address 0x4 - core index']
  #allocation1 [shape = 'u32[144,128]{1,0:T(1,128)}', space=vmem, size = 0x12000, scoped, tag = 'internal scratch']
  %s0 = inlined_call_operand.vmem [shape: f32[2,8,8], index: 0, kind: input, shape index: {}]
  %s1 = inlined_call_operand.vmem [shape: f32[24,2], index: 1, kind: input, shape index: {}]
  %s2 = inlined_call_operand.vmem [shape: f32[1,2], index: 2, kind: input, shape index: {}]
  %s3 = inlined_call_operand.vmem [shape: f32[1,2], index: 3, kind: input, shape index: {}]
  %s4 = inlined_call_operand.vmem [shape: f32[1,2], index: 4, kind: input, shape index: {}]
  %s5 = inlined_call_operand.vmem [shape: f32[2,8], index: 5, kind: input, shape index: {}]
  %s6 = inlined_call_operand.vmem [shape: f32[1,8], index: 6, kind: input, shape index: {}]
  %s7 = inlined_call_operand.vmem [shape: f32[2,8,8], index: 7, kind: output, shape index: {}]
  %s8 = sld [smem:[#allocation0]]
  $region38: #{tfam_forward.4} parent=0
    _
  %s10 = ssub.s32 1, %s8
  %s11 = scalar_select 0, %s10, %s8
  // Predicated region
  $region2: #{tfam_forward.4} parent=0 // pred_check
    _
  $region3: #{tfam_forward.4} parent=0 // pred_check_branch
    %13 = sbr.rel (0) target = $region5
  $region4: #{tfam_forward.4} parent=0 // pred_region
    _
  $region5: #{tfam_forward.4} parent=0 // pred_fallthru
    _
  // Predicated region
  $region6: #{tfam_forward.4} parent=0 // pred_check
    _
  $region7: #{tfam_forward.4} parent=0 // pred_check_branch
    %15 = sbr.rel (0) target = $region9
  $region8: #{tfam_forward.4} parent=0 // pred_region
    _
  $region9: #{tfam_forward.4} parent=0 // pred_fallthru
    _
  // Predicated region
  $region10: #{tfam_forward.4} parent=0 // pred_check
    _
  $region11: #{tfam_forward.4} parent=0 // pred_check_branch
    %17 = sbr.rel (0) target = $region13
  $region12: #{tfam_forward.4} parent=0 // pred_region
    _
  $region13: #{tfam_forward.4} parent=0 // pred_fallthru
    _
  // Predicated region
  $region14: #{tfam_forward.4} parent=0 // pred_check
    _
  $region15: #{tfam_forward.4} parent=0 // pred_check_branch
    %19 = sbr.rel (0) target = $region17
  $region16: #{tfam_forward.4} parent=0 // pred_region
    _
  $region17: #{tfam_forward.4} parent=0 // pred_fallthru
    _
  // Predicated region
  $region18: #{tfam_forward.4} parent=0 // pred_check
    _
  $region19: #{tfam_forward.4} parent=0 // pred_check_branch
    %21 = sbr.rel (0) target = $region21
  $region20: #{tfam_forward.4} parent=0 // pred_region
    _
  $region21: #{tfam_forward.4} parent=0 // pred_fallthru
    _
  // Predicated region
  $region22: #{tfam_forward.4} parent=0 // pred_check
    _
  $region23: #{tfam_forward.4} parent=0 // pred_check_branch
    %23 = sbr.rel (0) target = $region25
  $region24: #{tfam_forward.4} parent=0 // pred_region
    _
  $region25: #{tfam_forward.4} parent=0 // pred_fallthru
    _
  // Predicated region
  $region26: #{tfam_forward.4} parent=0 // pred_check
    _
  $region27: #{tfam_forward.4} parent=0 // pred_check_branch
    %25 = sbr.rel (0) target = $region29
  $region28: #{tfam_forward.4} parent=0 // pred_region
    _
  $region29: #{tfam_forward.4} parent=0 // pred_fallthru
    _
  %v26 = vld [vmem:[%s0] sm:$0xff]
  %v27 = vld [vmem:[%s0 + $0x8] sm:$0xff]
  %v30 = vrot.slane %v26, 7
  %v31 = vrot.slane %v27, 7
  %vm34 = vcmask 1040384
  %v35 = vsel %vm34, 0.0, %v30
  %v36 = vsel %vm34, 0.0, %v31
  %v37 = vrot.slane %v26, 1
  %v38 = vrot.slane %v27, 1
  %vm41 = vcmask 1046528
  %v42 = vsel %vm41, %v37, 0.0
  %v43 = vsel %vm41, %v38, 0.0
  %44 = vrot.lane.b32.xlu0 %v26, 8
  %v45 = vpop.permute.xlu0 %44
  %46 = vrot.lane.b32.xlu0 %v27, 8
  %v47 = vpop.permute.xlu0 %46
  %52 = vrot.lane.b32.xlu0 %v42, 16
  %v53 = vpop.permute.xlu0 %52
  %54 = vrot.lane.b32.xlu0 %v43, 16
  %v55 = vpop.permute.xlu0 %54
  %vm58 = vcmask 64512
  %v59 = vsel %vm58, %v35, %v45
  %v60 = vsel %vm58, %v36, %v47
  %vm61 = vcmask 130048
  %v62 = vsel %vm61, %v59, %v53
  %v63 = vsel %vm61, %v60, %v55
  %v64 = vld [vmem:[%s1] sm:$0xff]
  %v65 = vld [vmem:[%s1 + $0x8] sm:$0xff]
  %v66 = vld [vmem:[%s1 + $0x10] sm:$0xff]
  %v67 = vld [vmem:[%s2] sm:$0x1]
  %v69 = vlaneseq
  %v70 = vshrl.u32 %v69, 7
  %v71 = vsub.s32 0, %v70
  %v72 = vrot.slane %v67, %v71
  %vm74 = vcmask 195584
  %v76 = vsel %vm74, %v62, 0
  %v79 = vsel %vm74, %v63, 0
  %81 = vmatprep.subr.mxu0 0.0
  %82 = vmatpush1.msra.mxu0 %v64
  %83 = vmatprep.subr.mxu0 0.0
  %84 = vmatpush1.msra.mxu0 %v65
  %85 = vmatprep.subr.mxu0 0.0
  %86 = vmatpush1.msra.mxu0 %v66
  %87 = vmatprep.subr.mxu0 0.0
  %88 = vmatpush1.msra.mxu0 0.0
  %89 = vmatprep.subr.mxu0 0.0
  %90 = vmatpush1.msra.mxu0 0.0
  %91 = vmatprep.subr.mxu0 0.0
  %92 = vmatpush1.msra.mxu0 0.0
  %93 = vmatprep.subr.mxu0 0.0
  %94 = vmatpush1.msra.mxu0 0.0
  %95 = vmatprep.subr.mxu0 0.0
  %96 = vmatpush1.msra.mxu0 0.0
  %97 = vmatprep.subr.mxu0 0.0
  %98 = vmatpush1.msra.mxu0 0.0
  %99 = vmatprep.subr.mxu0 0.0
  %100 = vmatpush1.msra.mxu0 0.0
  %101 = vmatprep.subr.mxu0 0.0
  %102 = vmatpush1.msra.mxu0 0.0
  %103 = vmatprep.subr.mxu0 0.0
  %104 = vmatpush1.msra.mxu0 0.0
  %105 = vmatprep.subr.mxu0 0.0
  %106 = vmatpush1.msra.mxu0 0.0
  %107 = vmatprep.subr.mxu0 0.0
  %108 = vmatpush1.msra.mxu0 0.0
  %109 = vmatprep.subr.mxu0 0.0
  %110 = vmatpush1.msra.mxu0 0.0
  %111 = vmatprep.subr.mxu0 0.0
  %112 = vmatpush1.msra.mxu0 0.0
  %113 = vmatprep.subr.mxu0 0.0
  %114 = vmatpush1.msra.mxu0 0.0
  %115 = vmatprep.subr.mxu0 0.0
  %116 = vmatpush1.msra.mxu0 0.0
  %117 = vmatprep.subr.mxu0 0.0
  %118 = vmatpush1.msra.mxu0 0.0
  %119 = vmatprep.subr.mxu0 0.0
  %120 = vmatpush1.msra.mxu0 0.0
  %121 = vmatprep.subr.mxu0 0.0
  %122 = vmatpush1.msra.mxu0 0.0
  %123 = vmatprep.subr.mxu0 0.0
  %124 = vmatpush1.msra.mxu0 0.0
  %125 = vmatprep.subr.mxu0 0.0
  %126 = vmatpush1.msra.mxu0 0.0
  %127 = vmatprep.subr.mxu0 0.0
  %128 = vmatpush1.msra.mxu0 0.0
  %129 = vmatprep.subr.mxu0 0.0
  %130 = vmatpush1.msra.mxu0 0.0
  %131 = vmatprep.subr.mxu0 0.0
  %132 = vmatpush1.msra.mxu0 0.0
  %133 = vmatprep.subr.mxu0 0.0
  %134 = vmatpush1.msra.mxu0 0.0
  %135 = vmatprep.subr.mxu0 0.0
  %136 = vmatpush1.msra.mxu0 0.0
  %137 = vmatprep.subr.mxu0 0.0
  %138 = vmatpush1.msra.mxu0 0.0
  %139 = vmatprep.subr.mxu0 0.0
  %140 = vmatpush1.msra.mxu0 0.0
  %141 = vmatprep.subr.mxu0 0.0
  %142 = vmatpush1.msra.mxu0 0.0
  %143 = vmatprep.subr.mxu0 0.0
  %144 = vmatpush1.msra.mxu0 0.0
  %145 = vmatprep.mubr.f32.mxu0 0.0
  %146 = vmatmul.mubr.f32.gmra.mrb[0].mxu0 %v76
  %v147 = vpop.f32.mrb[0].mxu0
  %v148 = vadd.f32 %v72, %v147
  %v149 = vpop.f32.mrb[0].mxu0
  %150 = vmatprep.mubr.f32.mxu0 0.0
  %151 = vmatmul.mubr.f32.gmra.mrb[0].mxu0 %v79
  %v152 = vpop.f32.mrb[0].mxu0
  %v153 = vadd.f32 %v72, %v152
  %v154 = vpop.f32.mrb[0].mxu0
  %155 = vdwg.mxu0
  %vm156 = vcmask 15360
  %v157 = vsel %vm156, %v148, 0.0
  %v158 = vsel %vm156, %v153, 0.0
  %v159 = vadd.f32 %v157, %v158
  %v160 = vrot.slane %v159, 4
  %v161 = vadd.f32 %v159, %v160
  %v162 = vrot.slane %v161, 2
  %v163 = vadd.f32 %v161, %v162
  %v164 = vrot.slane %v163, 1
  %v165 = vadd.f32 %v163, %v164
  %v166 = vrcp.pop 16.0
  %v167 = vmul.f32 %v165, %v166
  %v168 = vsub.f32 %v148, %v167
  %v169 = vsub.f32 %v153, %v167
  %v170 = vmul.f32 %v168, %v168
  %v171 = vmul.f32 %v169, %v169
  %v172 = vsel %vm156, %v170, 0.0
  %v173 = vsel %vm156, %v171, 0.0
  %v174 = vadd.f32 %v172, %v173
  %v175 = vrot.slane %v174, 4
  %v176 = vadd.f32 %v174, %v175
  %v177 = vrot.slane %v176, 2
  %v178 = vadd.f32 %v176, %v177
  %v179 = vrot.slane %v178, 1
  %v180 = vadd.f32 %v178, %v179
  %v181 = vmul.f32 %v180, %v166
  %v182 = vadd.f32 %v181, 1e-05
  %v183 = vrsqrt.pop %v182
  %v184 = vmul.f32 %v168, %v183
  %v185 = vmul.f32 %v169, %v183
  %v186 = vld [vmem:[%s3] sm:$0x1]
  %v188 = vlaneseq
  %v189 = vshrl.u32 %v188, 7
  %v190 = vsub.s32 0, %v189
  %v191 = vrot.slane %v186, %v190
  %v193 = vmul.f32 %v191, %v184
  %v194 = vmul.f32 %v191, %v185
  %v195 = vld [vmem:[%s4] sm:$0x1]
  %v197 = vlaneseq
  %v198 = vshrl.u32 %v197, 7
  %v199 = vsub.s32 0, %v198
  %v200 = vrot.slane %v195, %v199
  %v202 = vadd.f32 %v193, %v200
  %v203 = vadd.f32 %v194, %v200
  %v204 = vmax.f32 %v202, 0.0
  %v205 = vmax.f32 %v203, 0.0
  %v206 = vld [vmem:[%s5] sm:$0x3]
  %v207 = vld [vmem:[%s6] sm:$0x1]
  %v209 = vlaneseq
  %v210 = vshrl.u32 %v209, 7
  %v211 = vsub.s32 0, %v210
  %v212 = vrot.slane %v207, %v211
  %v215 = vsel %vm156, %v204, 0
  %v218 = vsel %vm156, %v205, 0
  %vm220 = vcmask 1041408
  %v222 = vsel %vm220, %v206, 0
  %224 = vmatprep.subr.mxu0 0.0
  %225 = vmatpush1.msra.mxu0 %v222
  %226 = vmatprep.subr.mxu0 0.0
  %227 = vmatpush1.msra.mxu0 0.0
  %228 = vmatprep.subr.mxu0 0.0
  %229 = vmatpush1.msra.mxu0 0.0
  %230 = vmatprep.subr.mxu0 0.0
  %231 = vmatpush1.msra.mxu0 0.0
  %232 = vmatprep.subr.mxu0 0.0
  %233 = vmatpush1.msra.mxu0 0.0
  %234 = vmatprep.subr.mxu0 0.0
  %235 = vmatpush1.msra.mxu0 0.0
  %236 = vmatprep.subr.mxu0 0.0
  %237 = vmatpush1.msra.mxu0 0.0
  %238 = vmatprep.subr.mxu0 0.0
  %239 = vmatpush1.msra.mxu0 0.0
  %240 = vmatprep.subr.mxu0 0.0
  %241 = vmatpush1.msra.mxu0 0.0
  %242 = vmatprep.subr.mxu0 0.0
  %243 = vmatpush1.msra.mxu0 0.0
  %244 = vmatprep.subr.mxu0 0.0
  %245 = vmatpush1.msra.mxu0 0.0
  %246 = vmatprep.subr.mxu0 0.0
  %247 = vmatpush1.msra.mxu0 0.0
  %248 = vmatprep.subr.mxu0 0.0
  %249 = vmatpush1.msra.mxu0 0.0
  %250 = vmatprep.subr.mxu0 0.0
  %251 = vmatpush1.msra.mxu0 0.0
  %252 = vmatprep.subr.mxu0 0.0
  %253 = vmatpush1.msra.mxu0 0.0
  %254 = vmatprep.subr.mxu0 0.0
  %255 = vmatpush1.msra.mxu0 0.0
  %256 = vmatprep.subr.mxu0 0.0
  %257 = vmatpush1.msra.mxu0 0.0
  %258 = vmatprep.subr.mxu0 0.0
  %259 = vmatpush1.msra.mxu0 0.0
  %260 = vmatprep.subr.mxu0 0.0
  %261 = vmatpush1.msra.mxu0 0.0
  %262 = vmatprep.subr.mxu0 0.0
  %263 = vmatpush1.msra.mxu0 0.0
  %264 = vmatprep.subr.mxu0 0.0
  %265 = vmatpush1.msra.mxu0 0.0
  %266 = vmatprep.subr.mxu0 0.0
  %267 = vmatpush1.msra.mxu0 0.0
  %268 = vmatprep.subr.mxu0 0.0
  %269 = vmatpush1.msra.mxu0 0.0
  %270 = vmatprep.subr.mxu0 0.0
  %271 = vmatpush1.msra.mxu0 0.0
  %272 = vmatprep.subr.mxu0 0.0
  %273 = vmatpush1.msra.mxu0 0.0
  %274 = vmatprep.subr.mxu0 0.0
  %275 = vmatpush1.msra.mxu0 0.0
  %276 = vmatprep.subr.mxu0 0.0
  %277 = vmatpush1.msra.mxu0 0.0
  %278 = vmatprep.subr.mxu0 0.0
  %279 = vmatpush1.msra.mxu0 0.0
  %280 = vmatprep.subr.mxu0 0.0
  %281 = vmatpush1.msra.mxu0 0.0
  %282 = vmatprep.subr.mxu0 0.0
  %283 = vmatpush1.msra.mxu0 0.0
  %284 = vmatprep.subr.mxu0 0.0
  %285 = vmatpush1.msra.mxu0 0.0
  %286 = vmatprep.subr.mxu0 0.0
  %287 = vmatpush1.msra.mxu0 0.0
  %288 = vmatprep.mubr.f32.mxu0 0.0
  %289 = vmatmul.mubr.f32.gmra.mrb[0].mxu0 %v215
  %v290 = vpop.f32.mrb[0].mxu0
  %v291 = vadd.f32 %v212, %v290
  %v292 = vpop.f32.mrb[0].mxu0
  %293 = vmatprep.mubr.f32.mxu0 0.0
  %294 = vmatmul.mubr.f32.gmra.mrb[0].mxu0 %v218
  %v295 = vpop.f32.mrb[0].mxu0
  %v296 = vadd.f32 %v212, %v295
  %v297 = vpop.f32.mrb[0].mxu0
  %298 = vdwg.mxu0
  %v299 = vxor.u32 %v291, 2147483648
  %v300 = vxor.u32 %v296, 2147483648
  %v301 = vmul.f32 %v299, 1.442695
  %v302 = vpow.pop %v301
  %v303 = vmul.f32 %v300, 1.442695
  %v304 = vpow.pop %v303
  %v305 = vadd.f32 %v302, 1.0
  %v306 = vadd.f32 %v304, 1.0
  %v307 = vrcp.pop %v305
  %v308 = vmul.f32 1.0, %v307
  %v309 = vrcp.pop %v306
  %v310 = vmul.f32 1.0, %v309
  %v311 = vadd.f32 %v308, 1.0
  %v312 = vadd.f32 %v310, 1.0
  %313 = vst.msk [vmem:[%s7] sm:$0xff] %vm58, %v311
  %314 = vst.msk [vmem:[%s7 + $0x8] sm:$0xff] %vm58, %v312
  // Predicated region
  $region30: #{tfam_forward.4} parent=0 // pred_check
    _
  $region31: #{tfam_forward.4} parent=0 // pred_check_branch
    %316 = sbr.rel (0) target = $region33
  $region32: #{tfam_forward.4} parent=0 // pred_region
    _
  $region33: #{tfam_forward.4} parent=0 // pred_fallthru
    _
  // Predicated region
  $region34: #{tfam_forward.4} parent=0 // pred_check
    _
  $region35: #{tfam_forward.4} parent=0 // pred_check_branch
    %318 = sbr.rel (0) target = $region37
  $region36: #{tfam_forward.4} parent=0 // pred_region
    _
  $region37: #{tfam_forward.4} parent=0 // pred_fallthru
    _

// kernel: tfam_forward.5
$region0: #{tfam_forward.5}
  #allocation0 [shape = 'u32[]', space=smem, size = 0x4, offset = 0x4, fixed_abs, tag = 'smem constant byte address 0x4 - core index']
  #allocation1 [shape = 'u32[144,128]{1,0:T(1,128)}', space=vmem, size = 0x12000, scoped, tag = 'internal scratch']
  %s0 = inlined_call_operand.vmem [shape: f32[2,8,8,256], index: 0, kind: input, shape index: {}]
  %s1 = inlined_call_operand.vmem [shape: f32[2,8,8], index: 1, kind: input, shape index: {}]
  %s2 = inlined_call_operand.vmem [shape: f32[2,8,8,256], index: 2, kind: output, shape index: {}]
  %s3 = sld [smem:[#allocation0]]
  $region41: #{tfam_forward.5} parent=0
    _
  %s5 = ssub.s32 1, %s3
  %s6 = scalar_select 0, %s5, %s3
  loop: start=0, step=1, limit=4
  $region2: #{tfam_forward.5} parent=0 // loop_pre_header
    _
  $region3: #{tfam_forward.5} parent=0 // loop_header
    %s8 = sphi 0, %s12
    %p9 = scmp.ge.s32.totalorder %s8, 4
    %s15 = sphi 0, %s34
    %s16 = sphi 0, %s30
    %s17 = sphi 0, %s26
    %s18 = sphi 0, %s15
    %s19 = sphi 0, %s16
    %s20 = sphi 0, %s17
    %s21 = sphi 0, %s18
    %s22 = sphi 0, %s19
    %s23 = sphi 0, %s20
    %s41 = sphi 0, %s43
    %s44 = sphi 0, %s41
    %s45 = sphi 0, %s44
    %s61 = sphi 0, %s45
    %s69 = sphi 0, %s71
    %s72 = sphi 0, %s69
    %s73 = sphi 0, %s72
    %s89 = sphi 0, %s73
    %s99 = sphi 0, %s101
    %s102 = sphi 0, %s99
    %s103 = sphi 0, %s102
    %s119 = sphi 0, %s103
  $region4: #{tfam_forward.5} parent=0 // loop_header_branch
    %11 = sbr.rel (%p9) target = $region8
  $region5: #{tfam_forward.5} parent=0 // loop_body
    %s13 = ssub.s32 %s8, 1
    %s14 = ssub.s32 %s8, 2
    %s24 = sadd.s32 1, %s17
    %p25 = scmp.ge.s32.totalorder %s24, 1
    %s26 = scalar_select %p25, 0, %s24
    %s27 = sadd.s32 1, %s16
    %s28 = scalar_select %p25, %s27, %s16
    %p29 = scmp.ge.s32.totalorder %s28, 1
    %s30 = scalar_select %p29, 0, %s28
    %s31 = sadd.s32 1, %s15
    %s32 = scalar_select %p29, %s31, %s15
    %p33 = scmp.ge.s32.totalorder %s32, 2
    %s34 = scalar_select %p33, 0, %s32
    %s35 = ssub.s32 %s15, %s34
    %s36 = ssub.s32 %s16, %s30
    %s37 = sor.u32 %s35, %s36
    %s38 = ssub.s32 %s17, %s26
    %s39 = sor.u32 %s37, %s38
    %p40 = scmp.eq.s32.totalorder %s39, 0
    %s42 = sadd.s32 %s41, 1
    %s43 = scalar_select %p40, %s41, %s42
    %p46 = pneg %p40
    %p47 = scmp.eq.s32.totalorder %s8, 1
    %p48 = por %p46, %p47
    %p49 = scmp.ne.s32.totalorder %s41, %s44
    %p50 = scmp.eq.s32.totalorder %s8, 0
    %p51 = por %p49, %p50
    %p52 = scmp.ne.s32.totalorder %s41, %s44
    %p53 = scmp.eq.s32.totalorder %s13, 1
    %p54 = por %p52, %p53
    %p55 = scmp.ne.s32.totalorder %s44, %s45
    %p56 = scmp.eq.s32.totalorder %s13, 0
    %p57 = por %p55, %p56
    %p58 = scmp.ne.s32.totalorder %s44, %s45
    %p59 = scmp.eq.s32.totalorder %s14, 1
    %p60 = por %p58, %p59
    %p62 = scmp.ne.s32.totalorder %s45, %s61
    %p63 = scmp.eq.s32.totalorder %s14, 0
    %p64 = por %p62, %p63
    %s65 = ssub.s32 %s15, %s34
    %s66 = ssub.s32 %s16, %s30
    %s67 = sor.u32 %s65, %s66
    %p68 = scmp.eq.s32.totalorder %s67, 0
    %s70 = sadd.s32 %s69, 1
    %s71 = scalar_select %p68, %s69, %s70
    %p74 = pneg %p68
    %p75 = scmp.eq.s32.totalorder %s8, 1
    %p76 = por %p74, %p75
    %p77 = scmp.ne.s32.totalorder %s69, %s72
    %p78 = scmp.eq.s32.totalorder %s8, 0
    %p79 = por %p77, %p78
    %p80 = scmp.ne.s32.totalorder %s69, %s72
    %p81 = scmp.eq.s32.totalorder %s13, 1
    %p82 = por %p80, %p81
    %p83 = scmp.ne.s32.totalorder %s72, %s73
    %p84 = scmp.eq.s32.totalorder %s13, 0
    %p85 = por %p83, %p84
    %p86 = scmp.ne.s32.totalorder %s72, %s73
    %p87 = scmp.eq.s32.totalorder %s14, 1
    %p88 = por %p86, %p87
    %p90 = scmp.ne.s32.totalorder %s73, %s89
    %p91 = scmp.eq.s32.totalorder %s14, 0
    %p92 = por %p90, %p91
    %s93 = ssub.s32 %s15, %s34
    %s94 = ssub.s32 %s16, %s30
    %s95 = sor.u32 %s93, %s94
    %s96 = ssub.s32 %s17, %s26
    %s97 = sor.u32 %s95, %s96
    %p98 = scmp.eq.s32.totalorder %s97, 0
    %s100 = sadd.s32 %s99, 1
    %s101 = scalar_select %p98, %s99, %s100
    %p104 = pneg %p98
    %p105 = scmp.eq.s32.totalorder %s8, 1
    %p106 = por %p104, %p105
    %p107 = scmp.ne.s32.totalorder %s99, %s102
    %p108 = scmp.eq.s32.totalorder %s8, 0
    %p109 = por %p107, %p108
    %p110 = scmp.ne.s32.totalorder %s99, %s102
    %p111 = scmp.eq.s32.totalorder %s13, 1
    %p112 = por %p110, %p111
    %p113 = scmp.ne.s32.totalorder %s102, %s103
    %p114 = scmp.eq.s32.totalorder %s13, 0
    %p115 = por %p113, %p114
    %p116 = scmp.ne.s32.totalorder %s102, %s103
    %p117 = scmp.eq.s32.totalorder %s14, 1
    %p118 = por %p116, %p117
    %p120 = scmp.ne.s32.totalorder %s103, %s119
    %p121 = scmp.eq.s32.totalorder %s14, 0
    %p122 = por %p120, %p121
    %p123 = scmp.le.s32.totalorder 1, %s8
    %p124 = scmp.lt.s32.totalorder %s8, 3
    %p125 = pnand %p123, %p124
    %p126 = pneg %p125
    // Predicated region
    $region9: #{tfam_forward.5} parent=5 // pred_check
      _
    $region10: #{tfam_forward.5} parent=5 // pred_check_branch
      %128 = sbr.rel (%p125) target = $region12
    $region11: #{tfam_forward.5} parent=5 // pred_region
      %s129 = ssub.s32 %s8, 1
    $region12: #{tfam_forward.5} parent=5 // pred_fallthru
      _
    %p130 = scmp.lt.s32.totalorder %s8, 2
    // Predicated region
    $region13: #{tfam_forward.5} parent=5 // pred_check
      %p131 = pneg %p130
    $region14: #{tfam_forward.5} parent=5 // pred_check_branch
      %133 = sbr.rel (%p131) target = $region16
    $region15: #{tfam_forward.5} parent=5 // pred_region
      // Predicated region
      $region17: #{tfam_forward.5} parent=15 // pred_check
        %p134 = pneg %p51
      $region18: #{tfam_forward.5} parent=15 // pred_check_branch
        %136 = sbr.rel (%p134) target = $region20
      $region19: #{tfam_forward.5} parent=15 // pred_region
        %s137 = smul.u32 8, %s16
        %s138 = smul.u32 2, %s17
        %p139 = scmp.lt.s32.totalorder %s15, 1
        %s140 = scalar_select %p139, %s15, 1
        %p141 = scmp.lt.s32.totalorder %s137, 7
        %s142 = scalar_select %p141, %s137, 7
        %p143 = scmp.lt.s32.totalorder %s138, 1
        %s144 = scalar_select %p143, %s138, 1
        %s145 = smul.addr %s142, 2
        %s146 = sadd.s32 %s144, %s145
        %s147 = smul.addr %s140, 16
        %s148 = sadd.s32 %s146, %s147
        %s149 = smul.addr %s148, 8
        %s150 = scalar_lea.vmem %s0, %s149
        %s151 = smul.u32 8, %s16
        %s152 = smul.u32 2, %s17
      $region20: #{tfam_forward.5} parent=15 // pred_fallthru
        _
      // Predicated region
      $region21: #{tfam_forward.5} parent=15 // pred_check
        %p153 = pneg %p79
      $region22: #{tfam_forward.5} parent=15 // pred_check_branch
        %155 = sbr.rel (%p153) target = $region24
      $region23: #{tfam_forward.5} parent=15 // pred_region
        %p156 = scmp.lt.s32.totalorder %s15, 1
        %s157 = scalar_select %p156, %s15, 1
        %p158 = scmp.lt.s32.totalorder %s16, 0
        %s159 = scalar_select %p158, %s16, 0
        %s160 = sadd.s32 %s159, %s157
        %s161 = smul.addr %s160, 8
        %s162 = scalar_lea.vmem %s1, %s161
      $region24: #{tfam_forward.5} parent=15 // pred_fallthru
        _
    $region16: #{tfam_forward.5} parent=5 // pred_fallthru
      _
    %p163 = scmp.le.s32.totalorder 1, %s8
    %p164 = scmp.lt.s32.totalorder %s8, 3
    %p165 = pnand %p163, %p164
    %p166 = pneg %p165
    // Predicated region
    $region25: #{tfam_forward.5} parent=5 // pred_check
      _
    $region26: #{tfam_forward.5} parent=5 // pred_check_branch
      %168 = sbr.rel (%p165) target = $region28
    $region27: #{tfam_forward.5} parent=5 // pred_region
      %s169 = ssub.s32 %s8, 1
      %s170 = smul.u32 8, %s19
      %s171 = smul.u32 2, %s20
      %p172 = scmp.lt.s32.totalorder %s18, 1
      %s173 = scalar_select %p172, %s18, 1
      %p174 = scmp.lt.s32.totalorder %s170, 7
      %s175 = scalar_select %p174, %s170, 7
      %p176 = scmp.lt.s32.totalorder %s171, 1
      %s177 = scalar_select %p176, %s171, 1
      %s178 = smul.addr %s175, 2
      %s179 = sadd.s32 %s177, %s178
      %s180 = smul.addr %s173, 16
      %s181 = sadd.s32 %s179, %s180
      %s182 = smul.addr %s181, 8
      %s183 = scalar_lea.vmem %s0, %s182
      %p184 = pneg %p57
      %p185 = pneg %p54
      %p186 = scmp.lt.s32.totalorder %s18, 1
      %s187 = scalar_select %p186, %s18, 1
      %p188 = scmp.lt.s32.totalorder %s19, 0
      %s189 = scalar_select %p188, %s19, 0
      %s190 = sadd.s32 %s189, %s187
      %s191 = smul.addr %s190, 8
      %s192 = scalar_lea.vmem %s1, %s191
      %p193 = pneg %p85
      %p194 = pneg %p82
      %p195 = pneg %p115
      %p196 = pneg %p112
      %s197 = smul.u32 8, %s19
      %s198 = smul.u32 2, %s20
      %p199 = scmp.lt.s32.totalorder %s18, 1
      %s200 = scalar_select %p199, %s18, 1
      %p201 = scmp.lt.s32.totalorder %s197, 7
      %s202 = scalar_select %p201, %s197, 7
      %p203 = scmp.lt.s32.totalorder %s198, 1
      %s204 = scalar_select %p203, %s198, 1
      %s205 = smul.addr %s202, 2
      %s206 = sadd.s32 %s204, %s205
      %s207 = smul.addr %s200, 16
      %s208 = sadd.s32 %s206, %s207
      %s209 = smul.addr %s208, 8
      %s210 = scalar_lea.vmem %s2, %s209
      %s211 = smul.u32 8, %s19
      %s212 = smul.u32 2, %s20
      %p213 = scmp.lt.s32.totalorder %s18, 1
      %s214 = scalar_select %p213, %s18, 1
      %p215 = scmp.lt.s32.totalorder %s211, 7
      %s216 = scalar_select %p215, %s211, 7
      %p217 = scmp.lt.s32.totalorder %s212, 1
      %s218 = scalar_select %p217, %s212, 1
      %s219 = smul.addr %s216, 2
      %s220 = sadd.s32 %s218, %s219
      %s221 = smul.addr %s214, 16
      %s222 = sadd.s32 %s220, %s221
      %s223 = smul.addr %s222, 8
      %s224 = scalar_lea.vmem %s0, %s223
      %s225 = smul.u32 8, %s19
      %s226 = smul.u32 2, %s20
      %p227 = scmp.lt.s32.totalorder %s18, 1
      %s228 = scalar_select %p227, %s18, 1
      %p229 = scmp.lt.s32.totalorder %s19, 0
      %s230 = scalar_select %p229, %s19, 0
      %s231 = sadd.s32 %s230, %s228
      %s232 = smul.addr %s231, 8
      %s233 = scalar_lea.vmem %s1, %s232
      %s234 = smul.u32 8, %s19
      %s235 = smul.u32 2, %s20
      %p236 = scmp.lt.s32.totalorder %s18, 1
      %s237 = scalar_select %p236, %s18, 1
      %p238 = scmp.lt.s32.totalorder %s234, 7
      %s239 = scalar_select %p238, %s234, 7
      %p240 = scmp.lt.s32.totalorder %s235, 1
      %s241 = scalar_select %p240, %s235, 1
      %s242 = smul.addr %s239, 2
      %s243 = sadd.s32 %s241, %s242
      %s244 = smul.addr %s237, 16
      %s245 = sadd.s32 %s243, %s244
      %s246 = smul.addr %s245, 8
      %s247 = scalar_lea.vmem %s2, %s246
      %s248 = smul.u32 8, %s19
      %s249 = smul.u32 2, %s20
      %v250 = vld [vmem:[%s233] sm:$0xff]
      %v251 = vld [vmem:[%s224] sm:$0xff]
      %v252 = vld [vmem:[%s224 + $0x8] sm:$0xff]
      %v253 = vld [vmem:[%s224 + $0x10] sm:$0xff]
      %v254 = vld [vmem:[%s224 + $0x18] sm:$0xff]
      %v255 = vld [vmem:[%s224 + $0x20] sm:$0xff]
      %v256 = vld [vmem:[%s224 + $0x28] sm:$0xff]
      %v257 = vld [vmem:[%s224 + $0x30] sm:$0xff]
      %v258 = vld [vmem:[%s224 + $0x38] sm:$0xff]
      %v259 = vld [vmem:[%s224 + $0x40] sm:$0xff]
      %v260 = vld [vmem:[%s224 + $0x48] sm:$0xff]
      %v261 = vld [vmem:[%s224 + $0x50] sm:$0xff]
      %v262 = vld [vmem:[%s224 + $0x58] sm:$0xff]
      %v263 = vld [vmem:[%s224 + $0x60] sm:$0xff]
      %v264 = vld [vmem:[%s224 + $0x68] sm:$0xff]
      %v265 = vld [vmem:[%s224 + $0x70] sm:$0xff]
      %v266 = vld [vmem:[%s224 + $0x78] sm:$0xff]
      %v267 = vlaneseq
      %v268 = vshrl.u32 %v267, 7
      %v269 = vsub.s32 0, %v268
      %v270 = vrot.slane %v250, %v269
      %272 = vbcast.lane.b32.xlu0 %v270, 256
      %v273 = vpop.permute.xlu0 %272
      %v274 = vlaneseq
      %v275 = vshrl.u32 %v274, 7
      %v276 = vsub.s32 1, %v275
      %v277 = vrot.slane %v250, %v276
      %279 = vbcast.lane.b32.xlu0 %v277, 256
      %v280 = vpop.permute.xlu0 %279
      %v281 = vlaneseq
      %v282 = vshrl.u32 %v281, 7
      %v283 = vsub.s32 2, %v282
      %v284 = vrot.slane %v250, %v283
      %286 = vbcast.lane.b32.xlu0 %v284, 256
      %v287 = vpop.permute.xlu0 %286
      %v288 = vlaneseq
      %v289 = vshrl.u32 %v288, 7
      %v290 = vsub.s32 3, %v289
      %v291 = vrot.slane %v250, %v290
      %293 = vbcast.lane.b32.xlu0 %v291, 256
      %v294 = vpop.permute.xlu0 %293
      %v295 = vlaneseq
      %v296 = vshrl.u32 %v295, 7
      %v297 = vsub.s32 4, %v296
      %v298 = vrot.slane %v250, %v297
      %300 = vbcast.lane.b32.xlu0 %v298, 256
      %v301 = vpop.permute.xlu0 %300
      %v302 = vlaneseq
      %v303 = vshrl.u32 %v302, 7
      %v304 = vsub.s32 5, %v303
      %v305 = vrot.slane %v250, %v304
      %307 = vbcast.lane.b32.xlu0 %v305, 256
      %v308 = vpop.permute.xlu0 %307
      %v309 = vlaneseq
      %v310 = vshrl.u32 %v309, 7
      %v311 = vsub.s32 6, %v310
      %v312 = vrot.slane %v250, %v311
      %314 = vbcast.lane.b32.xlu0 %v312, 256
      %v315 = vpop.permute.xlu0 %314
      %v316 = vlaneseq
      %v317 = vshrl.u32 %v316, 7
      %v318 = vsub.s32 7, %v317
      %v319 = vrot.slane %v250, %v318
      %321 = vbcast.lane.b32.xlu0 %v319, 256
      %v322 = vpop.permute.xlu0 %321
      %v323 = vmul.f32 %v251, %v273
      %v324 = vmul.f32 %v252, %v273
      %v325 = vmul.f32 %v253, %v280
      %v326 = vmul.f32 %v254, %v280
      %v327 = vmul.f32 %v255, %v287
      %v328 = vmul.f32 %v256, %v287
      %v329 = vmul.f32 %v257, %v294
      %v330 = vmul.f32 %v258, %v294
      %v331 = vmul.f32 %v259, %v301
      %v332 = vmul.f32 %v260, %v301
      %v333 = vmul.f32 %v261, %v308
      %v334 = vmul.f32 %v262, %v308
      %v335 = vmul.f32 %v263, %v315
      %v336 = vmul.f32 %v264, %v315
      %v337 = vmul.f32 %v265, %v322
      %v338 = vmul.f32 %v266, %v322
      %339 = vst [vmem:[%s247] sm:$0xff] %v323
      %340 = vst [vmem:[%s247 + $0x8] sm:$0xff] %v324
      %341 = vst [vmem:[%s247 + $0x10] sm:$0xff] %v325
      %342 = vst [vmem:[%s247 + $0x18] sm:$0xff] %v326
      %343 = vst [vmem:[%s247 + $0x20] sm:$0xff] %v327
      %344 = vst [vmem:[%s247 + $0x28] sm:$0xff] %v328
      %345 = vst [vmem:[%s247 + $0x30] sm:$0xff] %v329
      %346 = vst [vmem:[%s247 + $0x38] sm:$0xff] %v330
      %347 = vst [vmem:[%s247 + $0x40] sm:$0xff] %v331
      %348 = vst [vmem:[%s247 + $0x48] sm:$0xff] %v332
      %349 = vst [vmem:[%s247 + $0x50] sm:$0xff] %v333
      %350 = vst [vmem:[%s247 + $0x58] sm:$0xff] %v334
      %351 = vst [vmem:[%s247 + $0x60] sm:$0xff] %v335
      %352 = vst [vmem:[%s247 + $0x68] sm:$0xff] %v336
      %353 = vst [vmem:[%s247 + $0x70] sm:$0xff] %v337
      %354 = vst [vmem:[%s247 + $0x78] sm:$0xff] %v338
      %s355 = smul.u32 8, %s19
      %s356 = smul.u32 2, %s20
      %p357 = scmp.lt.s32.totalorder %s18, 1
      %s358 = scalar_select %p357, %s18, 1
      %p359 = scmp.lt.s32.totalorder %s355, 7
      %s360 = scalar_select %p359, %s355, 7
      %p361 = scmp.lt.s32.totalorder %s356, 1
      %s362 = scalar_select %p361, %s356, 1
      %s363 = smul.addr %s360, 2
      %s364 = sadd.s32 %s362, %s363
      %s365 = smul.addr %s358, 16
      %s366 = sadd.s32 %s364, %s365
      %s367 = smul.addr %s366, 8
      %s368 = scalar_lea.vmem %s2, %s367
      // Predicated region
      $region29: #{tfam_forward.5} parent=27 // pred_check
        %p369 = pneg %p112
      $region30: #{tfam_forward.5} parent=27 // pred_check_branch
        %371 = sbr.rel (%p369) target = $region32
      $region31: #{tfam_forward.5} parent=27 // pred_region
        %s372 = smul.u32 8, %s19
        %s373 = smul.u32 2, %s20
      $region32: #{tfam_forward.5} parent=27 // pred_fallthru
        _
    $region28: #{tfam_forward.5} parent=5 // pred_fallthru
      _
    %p374 = scmp.le.s32.totalorder 2, %s8
    // Predicated region
    $region33: #{tfam_forward.5} parent=5 // pred_check
      %p375 = pneg %p374
    $region34: #{tfam_forward.5} parent=5 // pred_check_branch
      %377 = sbr.rel (%p375) target = $region36
    $region35: #{tfam_forward.5} parent=5 // pred_region
      %s378 = ssub.s32 %s8, 2
      // Predicated region
      $region37: #{tfam_forward.5} parent=35 // pred_check
        %p379 = pneg %p118
      $region38: #{tfam_forward.5} parent=35 // pred_check_branch
        %381 = sbr.rel (%p379) target = $region40
      $region39: #{tfam_forward.5} parent=35 // pred_region
        %s382 = smul.u32 8, %s22
        %s383 = smul.u32 2, %s23
        %p384 = scmp.lt.s32.totalorder %s21, 1
        %s385 = scalar_select %p384, %s21, 1
        %p386 = scmp.lt.s32.totalorder %s382, 7
        %s387 = scalar_select %p386, %s382, 7
        %p388 = scmp.lt.s32.totalorder %s383, 1
        %s389 = scalar_select %p388, %s383, 1
        %s390 = smul.addr %s387, 2
        %s391 = sadd.s32 %s389, %s390
        %s392 = smul.addr %s385, 16
        %s393 = sadd.s32 %s391, %s392
        %s394 = smul.addr %s393, 8
        %s395 = scalar_lea.vmem %s2, %s394
      $region40: #{tfam_forward.5} parent=35 // pred_fallthru
        _
    $region36: #{tfam_forward.5} parent=5 // pred_fallthru
      _
  $region6: #{tfam_forward.5} parent=0 // loop_footer
    %s12 = sadd.s32 1, %s8
  $region7: #{tfam_forward.5} parent=0 // loop_footer_branch
    %7 = sbr.rel target = $region3
  $region8: #{tfam_forward.5} parent=0 // loop_exit
    _

</llo_original>
